<compile_context>
chip_gen: v7x
topology: tpu7x:2x2x1
jax: 0.10.0
libtpu: 0.0.40
codegen_flags: <defaults>
</compile_context>

<pallas_src>
import functools

import jax
import jax.numpy as jnp
import numpy as np
from jax.experimental import pallas as pl
from jax.experimental.pallas import tpu as pltpu


def _round_up(x, m):
    return ((x + m - 1) // m) * m


@functools.lru_cache(maxsize=None)
def _vmem_limit_bytes():
    """~75% of this generation's physical VMEM (64 MiB v7x, 128 MiB v5e/v6e)."""
    try:
        cap = int(pltpu.get_tpu_info().vmem_capacity_bytes)
    except Exception:
        cap = 64 * 1024 * 1024
    return max(32 * 1024 * 1024, (cap * 3) // 4)


def _pick_tile(dim_padded, cap=512):
    """Pick an N/K tile that divides dim_padded (a multiple of 128)."""
    if dim_padded <= cap:
        return dim_padded
    for t in (512, 256, 128):
        if dim_padded % t == 0:
            return t
    return 128


def _pick_tm_and_mp(batch):
    """Largest batch tile that keeps M padding waste under ~12.5%."""
    mp_min = _round_up(batch, 8)
    budget = mp_min + mp_min // 8
    for tm in (512, 256, 128, 64, 32, 16, 8):
        if _round_up(batch, tm) <= budget:
            return tm, _round_up(batch, tm)
    return 8, mp_min


# ----------------------------------------------------------------------------
# Activation helper (traced inside the kernel body)
# ----------------------------------------------------------------------------
def _apply_activation(y, acti_fn):
    if acti_fn == "none":
        return y
    if acti_fn == "relu":
        return jnp.maximum(y, 0.0)
    if acti_fn == "lrelu":
        # nn.LeakyReLU() default negative_slope = 0.01
        return jnp.where(y >= 0.0, y, 0.01 * y)
    if acti_fn == "sigmoid":
        return jax.nn.sigmoid(y)
    if acti_fn == "tanh":
        return jnp.tanh(y)
    raise Exception("Unsupported activation function: " + str(acti_fn))


# ----------------------------------------------------------------------------
# Kernels
# ----------------------------------------------------------------------------
def _linear_bias_fast_kernel(x_ref, w_ref, b_ref, o_ref, *, acti_fn):
    """Single-K-tile fast path: y = x @ W_t + b ; activation.  Grid = (M/tm, N/tn)."""
    y = jnp.dot(x_ref[...], w_ref[...], preferred_element_type=jnp.float32)
    y = y + b_ref[...]
    o_ref[...] = _apply_activation(y, acti_fn).astype(o_ref.dtype)


def _linear_bias_kernel(x_ref, w_ref, b_ref, o_ref, acc_ref, *, acti_fn):
    """Tiled  y = x @ W_t + b ; activation.  Grid = (M/tm, N/tn, K/tk)."""
    k = pl.program_id(2)

    @pl.when(k == 0)
    def _():
        acc_ref[...] = jnp.zeros_like(acc_ref)

    acc_ref[...] += jnp.dot(x_ref[...], w_ref[...],
                            preferred_element_type=jnp.float32)

    @pl.when(k == pl.num_programs(2) - 1)
    def _():
        y = acc_ref[...] + b_ref[...]
        o_ref[...] = _apply_activation(y, acti_fn).astype(o_ref.dtype)


def _linear_switchnorm_kernel(mix_ref, x_ref, w_ref, gamma_ref, beta_ref,
                              o_ref, *, acti_fn, eps, b_valid, n_valid):
    """y = SwitchNorm1d(x @ W_t) ; activation.  Grid = (K/tk,).

    The f32 output block has a constant block index across the grid, so it is
    VMEM-resident and doubles as the matmul accumulator (no scratch slab).
    """
    k = pl.program_id(0)

    @pl.when(k == 0)
    def _():
        o_ref[...] = jnp.zeros_like(o_ref)

    o_ref[...] += jnp.dot(x_ref[...], w_ref[...],
                          preferred_element_type=jnp.float32)

    @pl.when(k == pl.num_programs(0) - 1)
    def _():
        y = o_ref[...]
        y2 = y * y

        # Single-pass statistics.  Padded rows/cols of y are exactly zero
        # (zero-padded x and W, no bias), so full-extent sums already equal the
        # sums over the valid region; only the divisors use the valid counts.
        row_s = jnp.sum(y, axis=1, keepdims=True)      # (Mp, 1)  LN
        row_ss = jnp.sum(y2, axis=1, keepdims=True)
        col_s = jnp.sum(y, axis=0, keepdims=True)      # (1, Np)  BN
        col_ss = jnp.sum(y2, axis=0, keepdims=True)

        mean_ln = row_s / n_valid
        var_ln = (row_ss - row_s * mean_ln) / max(n_valid - 1, 1)  # ddof=1
        mean_bn = col_s / b_valid
        var_bn = (col_ss - col_s * mean_bn) / max(b_valid - 1, 1)

        # softmax(mean_weight), softmax(var_weight) precomputed in the wrapper
        # and scalar-prefetched into SMEM.
        mw0, mw1 = mix_ref[0], mix_ref[1]
        vw0, vw1 = mix_ref[2], mix_ref[3]

        mean = mw0 * mean_ln + mw1 * mean_bn
        var = jnp.maximum(vw0 * var_ln + vw1 * var_bn, 0.0)

        yn = (y - mean) * jax.lax.rsqrt(var + eps)     # rsqrt -> EUP slot
        yn = yn * gamma_ref[...] + beta_ref[...]
        o_ref[...] = _apply_activation(yn, acti_fn).astype(o_ref.dtype)


# ----------------------------------------------------------------------------
# Parameter init (deterministic; mirrors nn.Linear / SwitchNorm1d defaults).
# Weights are pre-padded / pre-cast ONCE here — no per-call pad/cast traffic.
# ----------------------------------------------------------------------------
def init_linear_block_params(key, n_in, n_out, norm_fn, mxu_dtype=jnp.bfloat16):
    kw, kb = jax.random.split(key)
    bound = 1.0 / np.sqrt(n_in)
    Kp = _round_up(n_in, 128)
    Np = _round_up(n_out, 128)

    w_t = jax.random.uniform(kw, (n_in, n_out), jnp.float32, -bound, bound)
    params = {
        "n_in": n_in,
        "n_out": n_out,
        # Pre-transposed (n_in, n_out), padded lane-dense, cast to MXU dtype.
        "weight_t": jnp.pad(w_t, ((0, Kp - n_in), (0, Np - n_out))).astype(mxu_dtype),
    }
    if norm_fn == "none":
        b = jax.random.uniform(kb, (n_out,), jnp.float32, -bound, bound)
        params["bias"] = jnp.pad(b, (0, Np - n_out)).reshape(1, Np)
    elif norm_fn == "switchnorm":
        params["sn_weight"] = jnp.pad(jnp.ones((1, n_out), jnp.float32),
                                      ((0, 0), (0, Np - n_out)))
        params["sn_bias"] = jnp.zeros((1, Np), jnp.float32)
        params["mean_weight"] = jnp.ones((2,), jnp.float32)
        params["var_weight"] = jnp.ones((2,), jnp.float32)
    else:
        raise Exception("Unsupported normalization: " + str(norm_fn))
    return params


# ----------------------------------------------------------------------------
# Wrapper around pallas_call
# ----------------------------------------------------------------------------
def linear_block_forward(x, params, norm_fn="none", acti_fn="none",
                         eps=1e-5, out_dtype=jnp.float32):
    """LinearBlock forward.  MXU operand dtype is fixed by the params (init)."""
    B, K = x.shape
    n_in, n_out = params["n_in"], params["n_out"]
    assert K == n_in, (K, n_in)

    w_p = params["weight_t"]                  # (Kp, Np), already padded + cast
    Kp, Np = w_p.shape
    mxu_dtype = w_p.dtype
    mxu_itemsize = w_p.dtype.itemsize
    vmem_limit = _vmem_limit_bytes()

    if norm_fn == "none":
        tm, Mp = _pick_tm_and_mp(B)
        tn = _pick_tile(Np)
        tk = _pick_tile(Kp)
        x_p = jnp.pad(x, ((0, Mp - B), (0, Kp - K))).astype(mxu_dtype)
        b_p = params["bias"]
        out_shape = jax.ShapeDtypeStruct((Mp, Np), out_dtype)
        cost = pl.CostEstimate(
            flops=2 * Mp * Np * Kp,
            transcendentals=Mp * Np if acti_fn in ("sigmoid", "tanh") else 0,
            bytes_accessed=(Mp * Kp + Kp * Np * (Mp // tm)) * mxu_itemsize
                           + Mp * Np * jnp.dtype(out_dtype).itemsize + Np * 4,
        )

        if Kp == tk:
            # Fast path: single contraction tile — no scratch, no epilogue.
            y = pl.pallas_call(
                functools.partial(_linear_bias_fast_kernel, acti_fn=acti_fn),
                out_shape=out_shape,
                grid=(Mp // tm, Np // tn),
                in_specs=[
                    pl.BlockSpec((tm, Kp), lambda i, j: (i, 0)),
                    pl.BlockSpec((Kp, tn), lambda i, j: (0, j)),
                    pl.BlockSpec((1, tn), lambda i, j: (0, j)),
                ],
                out_specs=pl.BlockSpec((tm, tn), lambda i, j: (i, j)),
                compiler_params=pltpu.CompilerParams(
                    dimension_semantics=("parallel", "parallel"),
                    vmem_limit_bytes=vmem_limit,
                ),
                cost_estimate=cost,
            )(x_p, w_p, b_p)
        else:
            y = pl.pallas_call(
                functools.partial(_linear_bias_kernel, acti_fn=acti_fn),
                out_shape=out_shape,
                grid=(Mp // tm, Np // tn, Kp // tk),
                in_specs=[
                    pl.BlockSpec((tm, tk), lambda i, j, k: (i, k)),
                    pl.BlockSpec((tk, tn), lambda i, j, k: (k, j)),
                    pl.BlockSpec((1, tn), lambda i, j, k: (0, j)),
                ],
                out_specs=pl.BlockSpec((tm, tn), lambda i, j, k: (i, j)),
                scratch_shapes=[pltpu.VMEM((tm, tn), jnp.float32)],
                compiler_params=pltpu.CompilerParams(
                    dimension_semantics=("parallel", "parallel", "arbitrary"),
                    vmem_limit_bytes=vmem_limit,
                ),
                cost_estimate=cost,
            )(x_p, w_p, b_p)
        return y[:B, :n_out]

    if norm_fn == "switchnorm":
        # SwitchNorm couples all of B (BN stats) and all of n_out (LN stats):
        # keep (B, n_out) VMEM-resident (as the output block itself) and tile
        # only the contraction axis.
        Mp = _round_up(B, 8)
        x_p = jnp.pad(x, ((0, Mp - B), (0, Kp - K))).astype(mxu_dtype)
        gamma = params["sn_weight"]
        beta = params["sn_bias"]
        # Grid-invariant 2-element softmaxes: precompute in the wrapper and
        # hand the 4 resulting scalars to SMEM via scalar prefetch.
        mix = jnp.concatenate(
            [jax.nn.softmax(params["mean_weight"]),
             jax.nn.softmax(params["var_weight"])]).astype(jnp.float32)

        tk = _pick_tile(Kp)

        def _vmem_estimate(tk_):
            return (2 * (Mp * tk_ + tk_ * Np) * mxu_itemsize   # pipelined stripes
                    + 2 * Mp * Np * 4                          # resident output
                    + 4 * Np * 4)                              # gamma / beta

        while tk > 128 and _vmem_estimate(tk) > vmem_limit:
            tk = max(t for t in (128, 256, 512) if t < tk and Kp % t == 0)

        kernel = functools.partial(
            _linear_switchnorm_kernel, acti_fn=acti_fn, eps=eps,
            b_valid=B, n_valid=n_out)
        cost = pl.CostEstimate(
            flops=2 * Mp * Np * Kp + 12 * Mp * Np,
            transcendentals=Mp * Np,
            bytes_accessed=(Mp * Kp + Kp * Np) * mxu_itemsize + Mp * Np * 4,
        )
        grid_spec = pltpu.PrefetchScalarGridSpec(
            num_scalar_prefetch=1,
            grid=(Kp // tk,),
            in_specs=[
                pl.BlockSpec((Mp, tk), lambda k, mix_ref: (0, k)),
                pl.BlockSpec((tk, Np), lambda k, mix_ref: (k, 0)),
                pl.BlockSpec((1, Np), lambda k, mix_ref: (0, 0)),
                pl.BlockSpec((1, Np), lambda k, mix_ref: (0, 0)),
            ],
            out_specs=pl.BlockSpec((Mp, Np), lambda k, mix_ref: (0, 0)),
        )
        y = pl.pallas_call(
            kernel,
            out_shape=jax.ShapeDtypeStruct((Mp, Np), jnp.float32),
            grid_spec=grid_spec,
            compiler_params=pltpu.CompilerParams(
                dimension_semantics=("arbitrary",),
                vmem_limit_bytes=vmem_limit,
            ),
            cost_estimate=cost,
        )(mix, x_p, w_p, gamma, beta)
        return y[:B, :n_out]

    raise Exception("Unsupported normalization: " + str(norm_fn))


# ----------------------------------------------------------------------------
# Pure-JAX reference (for in-script sanity check)
# ----------------------------------------------------------------------------
def linear_block_reference(x, params, norm_fn, acti_fn, eps=1e-5):
    n_in, n_out = params["n_in"], params["n_out"]
    w = params["weight_t"][:n_in, :n_out].astype(jnp.float32)
    y = x @ w
    if norm_fn == "none":
        y = y + params["bias"][0, :n_out]
    elif norm_fn == "switchnorm":
        gamma = params["sn_weight"][0, :n_out]
        beta = params["sn_bias"][0, :n_out]
        mean_ln = jnp.mean(y, axis=1, keepdims=True)
        var_ln = jnp.var(y, axis=1, keepdims=True, ddof=1)
        mean_bn = jnp.mean(y, axis=0, keepdims=True)
        var_bn = jnp.var(y, axis=0, keepdims=True, ddof=1)
        mw = jax.nn.softmax(params["mean_weight"])
        vw = jax.nn.softmax(params["var_weight"])
        mean = mw[0] * mean_ln + mw[1] * mean_bn
        var = vw[0] * var_ln + vw[1] * var_bn
        y = (y - mean) / jnp.sqrt(var + eps)
        y = y * gamma + beta
    return _apply_activation(y, acti_fn)


if __name__ == "__main__":
    key = jax.random.PRNGKey(0)
    kx, kp1, kp2, km, kv = jax.random.split(key, 5)

    B, n_in, n_out = 8, 32, 64
    x = jax.random.normal(kx, (B, n_in), jnp.float32)

    # Config 1: LinearBlock(norm_fn='none', acti_fn='relu'), f32 MXU operands.
    p1 = init_linear_block_params(kp1, n_in, n_out, "none", mxu_dtype=jnp.float32)
    out1 = jax.block_until_ready(
        linear_block_forward(x, p1, norm_fn="none", acti_fn="relu"))
    ref1 = linear_block_reference(x, p1, "none", "relu")
    np.testing.assert_allclose(np.asarray(out1), np.asarray(ref1),
                               rtol=2e-3, atol=2e-3)

    # Config 2: LinearBlock(norm_fn='switchnorm', acti_fn='tanh'), f32 MXU operands.
    p2 = init_linear_block_params(kp2, n_in, n_out, "switchnorm",
                                  mxu_dtype=jnp.float32)
    p2["mean_weight"] = jax.random.normal(km, (2,), jnp.float32)
    p2["var_weight"] = jax.random.normal(kv, (2,), jnp.float32)
    out2 = jax.block_until_ready(
        linear_block_forward(x, p2, norm_fn="switchnorm", acti_fn="tanh"))
    ref2 = linear_block_reference(x, p2, "switchnorm", "tanh")
    np.testing.assert_allclose(np.asarray(out2), np.asarray(ref2),
                               rtol=2e-3, atol=2e-3)

    # Config 3: default bf16 MXU operands (faster, half the operand DMA).
    p3 = init_linear_block_params(kp1, n_in, n_out, "none")   # bf16 default
    out3 = jax.block_until_ready(
        linear_block_forward(x, p3, norm_fn="none", acti_fn="lrelu"))
    ref3 = linear_block_reference(x, p3, "none", "lrelu")
    np.testing.assert_allclose(np.asarray(out3), np.asarray(ref3),
                               rtol=2e-2, atol=2e-2)

    print("KERNEL_OK")
</pallas_src>

<mosaic_0001>
module attributes {stable_mosaic.version = 11 : i64} {
  func.func @_linear_bias_fast_kernel(%arg0: i32, %arg1: i32, %arg2: memref<8x128xf32, #tpu.memory_space<vmem>>, %arg3: memref<128x128xf32, #tpu.memory_space<vmem>>, %arg4: memref<1x128xf32, #tpu.memory_space<vmem>>, %arg5: memref<8x128xf32, #tpu.memory_space<vmem>>) attributes {dimension_semantics = [#tpu.dimension_semantics<parallel>, #tpu.dimension_semantics<parallel>], iteration_bounds = array<i64: 1, 1>, scalar_prefetch = 0 : i64, scratch_operands = 0 : i64, tpu.core_type = #tpu.core_type<tc>, window_params = [{transform_indices = @transform_0, window_bounds = array<i64: 8, 128>}, {transform_indices = @transform_1, window_bounds = array<i64: 128, 128>}, {transform_indices = @transform_2, window_bounds = array<i64: 1, 128>}, {transform_indices = @transform_3, window_bounds = array<i64: 8, 128>}]} {
    %c0 = arith.constant 0 : index
    %c0_0 = arith.constant 0 : index
    %0 = vector.load %arg2[%c0, %c0_0] : memref<8x128xf32, #tpu.memory_space<vmem>>, vector<8x128xf32>
    %c0_1 = arith.constant 0 : index
    %c0_2 = arith.constant 0 : index
    %1 = vector.load %arg3[%c0_1, %c0_2] : memref<128x128xf32, #tpu.memory_space<vmem>>, vector<128x128xf32>
    %cst = arith.constant dense<0.000000e+00> : vector<8x128xf32>
    %2 = tpu.matmul %0, %1, %cst {dimension_numbers = #tpu.dot_dimension_numbers<[1], [0], [0], [1], [0, 0, 1, 1], [], []>} : vector<8x128xf32>, vector<128x128xf32>, vector<8x128xf32> -> vector<8x128xf32>
    %c0_3 = arith.constant 0 : index
    %c0_4 = arith.constant 0 : index
    %3 = vector.load %arg4[%c0_3, %c0_4] : memref<1x128xf32, #tpu.memory_space<vmem>>, vector<1x128xf32>
    %4 = vector.broadcast %3 : vector<1x128xf32> to vector<8x128xf32>
    %5 = arith.addf %2, %4 : vector<8x128xf32>
    %cst_5 = arith.constant 0.000000e+00 : f32
    %6 = vector.broadcast %cst_5 : f32 to vector<8x128xf32>
    %7 = arith.maximumf %5, %6 : vector<8x128xf32>
    %c0_6 = arith.constant 0 : index
    %c0_7 = arith.constant 0 : index
    %8 = vector.load %arg5[%c0_6, %c0_7] : memref<8x128xf32, #tpu.memory_space<vmem>>, vector<8x128xf32>
    tpu.vector_store %arg5[%c0_6, %c0_7], %7 {strides = array<i32>} : memref<8x128xf32, #tpu.memory_space<vmem>>, vector<8x128xf32>,
    return
  }
  func.func @transform_0(%arg0: i32, %arg1: i32) -> (i32, i32) {
    %c0_i32 = arith.constant 0 : i32
    %c0_i32_0 = arith.constant 0 : i32
    return %arg0, %c0_i32 : i32, i32
  }
  func.func @transform_1(%arg0: i32, %arg1: i32) -> (i32, i32) {
    %c0_i32 = arith.constant 0 : i32
    %c0_i32_0 = arith.constant 0 : i32
    return %c0_i32, %arg1 : i32, i32
  }
  func.func @transform_2(%arg0: i32, %arg1: i32) -> (i32, i32) {
    %c0_i32 = arith.constant 0 : i32
    %c0_i32_0 = arith.constant 0 : i32
    return %c0_i32, %arg1 : i32, i32
  }
  func.func @transform_3(%arg0: i32, %arg1: i32) -> (i32, i32) {
    %c0_i32 = arith.constant 0 : i32
    return %arg0, %arg1 : i32, i32
  }
}

</mosaic_0001>

<llo_original>
// kernel: tpu_custom_call.1
$region0: #{tpu_custom_call.1}
  #allocation0 [shape = 'u32[]', space=smem, size = 0x4, offset = 0x4, fixed_abs, tag = 'smem constant byte address 0x4 - core index']
  #allocation1 [shape = 'u32[144,128]{1,0:T(1,128)}', space=vmem, size = 0x12000, scoped, tag = 'internal scratch']
  %s0 = inlined_call_operand.hbm [shape: f32[8,128], index: 0, kind: input, shape index: {}]
  %s1 = inlined_call_operand.hbm [shape: f32[128,128], index: 1, kind: input, shape index: {}]
  %s2 = inlined_call_operand.vmem [shape: f32[1,128], index: 2, kind: input, shape index: {}]
  %s3 = inlined_call_operand.hbm [shape: f32[8,128], index: 3, kind: output, shape index: {}]
  %s4 = sld [smem:[#allocation0]]
  $region30: #{tpu_custom_call.1} parent=0
    _
  %s6 = ssub.s32 1, %s4
  %s7 = scalar_select 0, %s6, %s4
  $region1: #{tpu_custom_call.1} parent=0
    #allocation2 [shape = 'u8[4096]{0}', space=vmem, size = 0x1000, scoped, tag = 'input window, operand 0, single buffered']
    #allocation3 [shape = 's32[1]{0}', space=sflag, size = 0x4, scoped, tag = 'scoped memory for tpu_custom_call.1']
    #allocation4 [shape = 's32[1]{0}', space=sflag, size = 0x4, scoped, tag = 'scoped memory for tpu_custom_call.1']
    #allocation5 [shape = 'u8[65536]{0}', space=vmem, size = 0x10000, scoped, tag = 'input window, operand 1, single buffered']
    #allocation6 [shape = 's32[1]{0}', space=sflag, size = 0x4, scoped, tag = 'scoped memory for tpu_custom_call.1']
    #allocation7 [shape = 'u8[4096]{0}', space=vmem, size = 0x1000, scoped, tag = 'output window, operand 0, single buffered']
    %8 = vsyncpa [#allocation3], 0
    %9 = vsyncpa [#allocation6], 0
    %10 = vsyncpa [#allocation4], 0
    // Predicated region
    $region2: #{tpu_custom_call.1} parent=1 // pred_check
      _
    $region3: #{tpu_custom_call.1} parent=1 // pred_check_branch
      %12 = sbr.rel (0) target = $region5
    $region4: #{tpu_custom_call.1} parent=1 // pred_region
      %s14 = ssub.s32 128, 128
      %15 = vsyncadd [#allocation3], %s14
      %s17 = sshll.u32 [#allocation2], 4
      %s18 = int_to_ptr.vmem [resolvable:$true] %s17
      %20 = dma.hbm_to_vmem [thread:$0]  %s0, 128, %s18, [#allocation3]
    $region5: #{tpu_custom_call.1} parent=1 // pred_fallthru
      _
    // Predicated region
    $region6: #{tpu_custom_call.1} parent=1 // pred_check
      _
    $region7: #{tpu_custom_call.1} parent=1 // pred_check_branch
      %22 = sbr.rel (0) target = $region9
    $region8: #{tpu_custom_call.1} parent=1 // pred_region
      %s24 = ssub.s32 2048, 2048
      %25 = vsyncadd [#allocation6], %s24
      %s26 = sshll.u32 [#allocation5], 4
      %s27 = int_to_ptr.vmem [resolvable:$true] %s26
      %32 = dma.hbm_to_vmem [thread:$0]  %s1, 2048, %s27, [#allocation6], 128, 128, 8
    $region9: #{tpu_custom_call.1} parent=1 // pred_fallthru
      _
    // Predicated region
    $region10: #{tpu_custom_call.1} parent=1 // pred_check
      _
    $region11: #{tpu_custom_call.1} parent=1 // pred_check_branch
      %34 = sbr.rel (0) target = $region13
    $region12: #{tpu_custom_call.1} parent=1 // pred_region
      _
    $region13: #{tpu_custom_call.1} parent=1 // pred_fallthru
      _
    // Predicated region
    $region14: #{tpu_custom_call.1} parent=1 // pred_check
      _
    $region15: #{tpu_custom_call.1} parent=1 // pred_check_branch
      %36 = sbr.rel (0) target = $region17
    $region16: #{tpu_custom_call.1} parent=1 // pred_region
      %37 = dma.done [#allocation3], 128
    $region17: #{tpu_custom_call.1} parent=1 // pred_fallthru
      _
    // Predicated region
    $region18: #{tpu_custom_call.1} parent=1 // pred_check
      _
    $region19: #{tpu_custom_call.1} parent=1 // pred_check_branch
      %39 = sbr.rel (0) target = $region21
    $region20: #{tpu_custom_call.1} parent=1 // pred_region
      %40 = dma.done [#allocation6], 2048
    $region21: #{tpu_custom_call.1} parent=1 // pred_fallthru
      _
    %v41 = vld [vmem:[#allocation2] sm:$0xff]
    %v42 = vld [vmem:[#allocation5] sm:$0xff]
    %v43 = vld [vmem:[#allocation5 + $0x8] sm:$0xff]
    %v44 = vld [vmem:[#allocation5 + $0x10] sm:$0xff]
    %v45 = vld [vmem:[#allocation5 + $0x18] sm:$0xff]
    %v46 = vld [vmem:[#allocation5 + $0x20] sm:$0xff]
    %v47 = vld [vmem:[#allocation5 + $0x28] sm:$0xff]
    %v48 = vld [vmem:[#allocation5 + $0x30] sm:$0xff]
    %v49 = vld [vmem:[#allocation5 + $0x38] sm:$0xff]
    %v50 = vld [vmem:[#allocation5 + $0x40] sm:$0xff]
    %v51 = vld [vmem:[#allocation5 + $0x48] sm:$0xff]
    %v52 = vld [vmem:[#allocation5 + $0x50] sm:$0xff]
    %v53 = vld [vmem:[#allocation5 + $0x58] sm:$0xff]
    %v54 = vld [vmem:[#allocation5 + $0x60] sm:$0xff]
    %v55 = vld [vmem:[#allocation5 + $0x68] sm:$0xff]
    %v56 = vld [vmem:[#allocation5 + $0x70] sm:$0xff]
    %v57 = vld [vmem:[#allocation5 + $0x78] sm:$0xff]
    %v58 = vld [vmem:[%s2] sm:$0x1]
    %v60 = vlaneseq
    %v61 = vshrl.u32 %v60, 7
    %v62 = vsub.s32 0, %v61
    %v63 = vrot.slane %v58, %v62
    %65 = vmatprep.subr.mxu0 0.0
    %66 = vmatpush1.msra.mxu0 %v42
    %67 = vmatprep.subr.mxu0 0.0
    %68 = vmatpush1.msra.mxu0 %v43
    %69 = vmatprep.subr.mxu0 0.0
    %70 = vmatpush1.msra.mxu0 %v44
    %71 = vmatprep.subr.mxu0 0.0
    %72 = vmatpush1.msra.mxu0 %v45
    %73 = vmatprep.subr.mxu0 0.0
    %74 = vmatpush1.msra.mxu0 %v46
    %75 = vmatprep.subr.mxu0 0.0
    %76 = vmatpush1.msra.mxu0 %v47
    %77 = vmatprep.subr.mxu0 0.0
    %78 = vmatpush1.msra.mxu0 %v48
    %79 = vmatprep.subr.mxu0 0.0
    %80 = vmatpush1.msra.mxu0 %v49
    %81 = vmatprep.subr.mxu0 0.0
    %82 = vmatpush1.msra.mxu0 %v50
    %83 = vmatprep.subr.mxu0 0.0
    %84 = vmatpush1.msra.mxu0 %v51
    %85 = vmatprep.subr.mxu0 0.0
    %86 = vmatpush1.msra.mxu0 %v52
    %87 = vmatprep.subr.mxu0 0.0
    %88 = vmatpush1.msra.mxu0 %v53
    %89 = vmatprep.subr.mxu0 0.0
    %90 = vmatpush1.msra.mxu0 %v54
    %91 = vmatprep.subr.mxu0 0.0
    %92 = vmatpush1.msra.mxu0 %v55
    %93 = vmatprep.subr.mxu0 0.0
    %94 = vmatpush1.msra.mxu0 %v56
    %95 = vmatprep.subr.mxu0 0.0
    %96 = vmatpush1.msra.mxu0 %v57
    %97 = vmatprep.subr.mxu0 0.0
    %98 = vmatpush1.msra.mxu0 0.0
    %99 = vmatprep.subr.mxu0 0.0
    %100 = vmatpush1.msra.mxu0 0.0
    %101 = vmatprep.subr.mxu0 0.0
    %102 = vmatpush1.msra.mxu0 0.0
    %103 = vmatprep.subr.mxu0 0.0
    %104 = vmatpush1.msra.mxu0 0.0
    %105 = vmatprep.subr.mxu0 0.0
    %106 = vmatpush1.msra.mxu0 0.0
    %107 = vmatprep.subr.mxu0 0.0
    %108 = vmatpush1.msra.mxu0 0.0
    %109 = vmatprep.subr.mxu0 0.0
    %110 = vmatpush1.msra.mxu0 0.0
    %111 = vmatprep.subr.mxu0 0.0
    %112 = vmatpush1.msra.mxu0 0.0
    %113 = vmatprep.subr.mxu0 0.0
    %114 = vmatpush1.msra.mxu0 0.0
    %115 = vmatprep.subr.mxu0 0.0
    %116 = vmatpush1.msra.mxu0 0.0
    %117 = vmatprep.subr.mxu0 0.0
    %118 = vmatpush1.msra.mxu0 0.0
    %119 = vmatprep.subr.mxu0 0.0
    %120 = vmatpush1.msra.mxu0 0.0
    %121 = vmatprep.subr.mxu0 0.0
    %122 = vmatpush1.msra.mxu0 0.0
    %123 = vmatprep.subr.mxu0 0.0
    %124 = vmatpush1.msra.mxu0 0.0
    %125 = vmatprep.subr.mxu0 0.0
    %126 = vmatpush1.msra.mxu0 0.0
    %127 = vmatprep.subr.mxu0 0.0
    %128 = vmatpush1.msra.mxu0 0.0
    %129 = vmatprep.mubr.f32.mxu0 0.0
    %130 = vmatmul.mubr.f32.gmra.mrb[0].mxu0 %v41
    %v131 = vpop.f32.mrb[0].mxu0
    %v132 = vadd.f32 %v63, %v131
    %v133 = vpop.f32.mrb[0].mxu0
    %134 = vdwg.mxu0
    %v135 = vmax.f32 %v132, 0.0
    %136 = vst [vmem:[#allocation7] sm:$0xff] %v135
    // Predicated region
    $region22: #{tpu_custom_call.1} parent=1 // pred_check
      _
    $region23: #{tpu_custom_call.1} parent=1 // pred_check_branch
      %138 = sbr.rel (0) target = $region25
    $region24: #{tpu_custom_call.1} parent=1 // pred_region
      %s140 = ssub.s32 128, 128
      %141 = vsyncadd [#allocation4], %s140
      %s143 = sshll.u32 [#allocation7], 4
      %s144 = int_to_ptr.vmem [resolvable:$true] %s143
      %146 = dma.vmem_to_hbm [thread:$0]  %s144, 128, %s3, [#allocation4]
    $region25: #{tpu_custom_call.1} parent=1 // pred_fallthru
      _
    // Predicated region
    $region26: #{tpu_custom_call.1} parent=1 // pred_check
      _
    $region27: #{tpu_custom_call.1} parent=1 // pred_check_branch
      %148 = sbr.rel (0) target = $region29
    $region28: #{tpu_custom_call.1} parent=1 // pred_region
      %149 = dma.done [#allocation4], 128
    $region29: #{tpu_custom_call.1} parent=1 // pred_fallthru
      _
    %150 = vsyncpa [#allocation3], 1
    %151 = vsyncpa [#allocation6], 1
    %152 = vsyncpa [#allocation4], 1

</llo_original>
